<compile_context>
chip_gen: v6e
topology: v6e:2x2x1
jax: 0.10.0
libtpu: 0.0.40
codegen_flags: <defaults>
</compile_context>

<pallas_src>
import math

import jax
import jax.numpy as jnp
from jax.experimental import pallas as pl
from jax.experimental.pallas import tpu as pltpu

AMP = 1.0 / math.sqrt(2.0 * math.pi)
SQRT2 = math.sqrt(2.0)

# Deterministic in-script "ELEMENTS" config (what the module __init__ expects).
ELEMENTS = {
    "BETA_WEIGHT": 1.0,
    "BETA_REG_WEIGHT": 0.0,
    "PHI_REG_WEIGHT": 0.0001,
    "LEAF_REG_WEIGHT": 0.0,
    "THETA_WEIGHT": 0.01,
    "UVD24_WEIGHT": 1.0,
    "XYZ24_WEIGHT": 0.0,
    "XYZ_SMPL24_WEIGHT": 0.0,
    "XYZ_SMPL17_WEIGHT": 0.0,
    "VERTICE_WEIGHT": 0.0,
    "TWIST_WEIGHT": 0.01,
}
SIZE_AVERAGE = True      # module default
MAX_TILE_B = 512         # rows per grid step; constant-VMEM across generations


# --------------------------------------------------------------------------- #
# Kernel: one batch tile -> 7 partial sums in a lane-dense (1, 8, 128) block
#   lane 0: sum((pred_shape*sw   - target_beta*sw)^2)
#   lane 1: sum((pred_theta*sw*tw - target_theta*sw*tw)^2)
#   lane 2: sum((pred_phi*tww    - target_twist*tww)^2)
#   lane 3: sum(weighted laplace terms)
#   lane 4: sum(uvd weights)
#   lane 5: sum((cam_trans*cw - target_trans*cw)^2)
#   lane 6: sum((cam_scale*cw - target_scale*cw)^2)
# --------------------------------------------------------------------------- #
def _loss_kernel(sw_ref, pshape_ref, tbeta_ref,
                 ptheta_ref, ttheta_ref, thw_ref,
                 pphi_ref, ttwist_ref, tww_ref,
                 puvd_ref, sigma_ref, tuvd_ref, uvdw_ref,
                 xyzw_ref, ptrans_ref, ttrans_ref, pscale_ref, tscale_ref,
                 out_ref):
    sw = sw_ref[...]                                                   # (TB, 1)

    # ---- MSE-style sum-of-squares terms (same FP ordering as PyTorch) ----
    d_beta = pshape_ref[...] * sw - tbeta_ref[...] * sw
    beta_ss = jnp.sum(d_beta * d_beta)

    thw = thw_ref[...]
    d_theta = ptheta_ref[...] * sw * thw - ttheta_ref[...] * sw * thw
    theta_ss = jnp.sum(d_theta * d_theta)

    tww = tww_ref[...]
    d_twist = pphi_ref[...] * tww - ttwist_ref[...] * tww
    twist_ss = jnp.sum(d_twist * d_twist)

    # ---- weighted Laplace term over the 29 uvd joints ----
    sigma = sigma_ref[...]
    w = uvdw_ref[...]
    diff = jnp.abs(puvd_ref[...] - tuvd_ref[...])
    lap = (jnp.log(sigma / AMP) + diff / (SQRT2 * sigma + 1e-9)) * w
    lap_sum = jnp.sum(lap)
    w_sum = jnp.sum(w)

    # ---- camera terms: per-row weight = 1 iff sum(target_xyz_weight) > 3 ----
    cam_w = (jnp.sum(xyzw_ref[...], axis=1, keepdims=True) > 3.0
             ).astype(jnp.float32)                                     # (TB, 1)
    d_tr = ptrans_ref[...] * cam_w - ttrans_ref[...] * cam_w
    d_sc = pscale_ref[...] * cam_w - tscale_ref[...] * cam_w
    trans_ss = jnp.sum(d_tr * d_tr)
    scale_ss = jnp.sum(d_sc * d_sc)

    # ---- emit lane-dense partials block (unmasked full-tile store) ----
    lane = jax.lax.broadcasted_iota(jnp.int32, (1, 8, 128), 2)
    partial = jnp.zeros((1, 8, 128), jnp.float32)
    for idx, v in enumerate(
            [beta_ss, theta_ss, twist_ss, lap_sum, w_sum, trans_ss, scale_ss]):
        partial = jnp.where(lane == idx, v, partial)
    out_ref[...] = partial


# --------------------------------------------------------------------------- #
# Public wrapper (PyTorch forward semantics)
# --------------------------------------------------------------------------- #
def laplace_loss_dim_smpl_cam(output, labels, size_average=SIZE_AVERAGE):
    B = output["pred_shape"].shape[0]

    # --- replicate the PyTorch slicing / reshaping (cheap XLA reshapes) -----
    pred_xyz = output["pred_xyz_jts_29"][:, :72]
    target_xyz_weight = labels["target_xyz_weight_24"][:, :pred_xyz.shape[1]]

    pred_uvd = output["pred_uvd_jts"].reshape(B, -1, 3)[:, :29]         # (B,29,3)
    pred_sigma = output["pred_sigma"].reshape(B, 29, -1)                # (B,29,S)
    target_uvd = labels["target_uvd_29"][:, :29 * 3].reshape(B, 29, 3)
    target_uvd_w = labels["target_weight_29"][:, :29 * 3].reshape(B, 29, 3)

    if pred_sigma.shape[-1] == target_uvd.shape[-1]:
        sigma3 = pred_sigma                       # common case: no broadcast at all
    else:
        # TODO(synk): stride-0 in-kernel read for the S==1 broadcast path.
        sigma3 = jnp.broadcast_to(pred_sigma, target_uvd.shape)

    f32 = lambda a: a.astype(jnp.float32)
    arrays = [
        f32(labels["target_smpl_weight"]),                  # 0  sw       (B, 1)
        f32(output["pred_shape"]),                          # 1           (B, 10)
        f32(labels["target_beta"]),                         # 2           (B, 10)
        f32(output["pred_theta_mats"]),                     # 3           (B, 96)
        f32(labels["target_theta"]),                        # 4           (B, 96)
        f32(labels["target_theta_weight"]),                 # 5           (B, 96)
        f32(output["pred_phi"].reshape(B, -1)),             # 6           (B, 46)
        f32(labels["target_twist"].reshape(B, -1)),         # 7           (B, 46)
        f32(labels["target_twist_weight"].reshape(B, -1)),  # 8           (B, 46)
        f32(pred_uvd.reshape(B, -1)),                       # 9           (B, 87)
        f32(sigma3.reshape(B, -1)),                         # 10 sigma    (B, 87)
        f32(target_uvd.reshape(B, -1)),                     # 11          (B, 87)
        f32(target_uvd_w.reshape(B, -1)),                   # 12          (B, 87)
        f32(target_xyz_weight),                             # 13          (B, 72)
        f32(output["cam_trans"]),                           # 14          (B, 3)
        f32(labels["camera_trans"]),                        # 15          (B, 3)
        f32(output["cam_scale"]),                           # 16          (B, 1)
        f32(labels["camera_scale"]),                        # 17          (B, 1)
    ]
    SIGMA_IDX = 10

    # True (unpadded) element counts for nn.MSELoss(reduction='mean').
    n_beta = float(B * arrays[1].shape[1])
    n_theta = float(B * arrays[3].shape[1])
    n_twist = float(B * arrays[6].shape[1])
    n_trans = float(B * arrays[14].shape[1])
    n_scale = float(B * arrays[16].shape[1])

    # --- constant-VMEM batch tiling -----------------------------------------
    if B <= MAX_TILE_B:
        tile_b, b_pad = B, B
    else:
        tile_b = MAX_TILE_B
        b_pad = ((B + tile_b - 1) // tile_b) * tile_b
    if b_pad != B:
        # Padding rows contribute exactly 0 to every partial sum
        # (sigma padded with 1.0 keeps log finite; its weight lane is 0).
        arrays = [
            jnp.pad(a, ((0, b_pad - B), (0, 0)),
                    constant_values=(1.0 if i == SIGMA_IDX else 0.0))
            for i, a in enumerate(arrays)
        ]
    num_blocks = b_pad // tile_b

    in_specs = [pl.BlockSpec((tile_b, a.shape[1]), lambda i: (i, 0))
                for a in arrays]
    out_spec = pl.BlockSpec((1, 8, 128), lambda i: (i, 0, 0))

    in_bytes = sum(int(a.size) * 4 for a in arrays)
    cost = pl.CostEstimate(
        flops=int(12 * sum(int(a.size) for a in arrays)),
        transcendentals=int(b_pad * arrays[SIGMA_IDX].shape[1]),
        bytes_accessed=int(in_bytes + num_blocks * 8 * 128 * 4),
    )

    partials_blocks = pl.pallas_call(
        _loss_kernel,
        out_shape=jax.ShapeDtypeStruct((num_blocks, 8, 128), jnp.float32),
        grid=(num_blocks,),
        in_specs=in_specs,
        out_specs=out_spec,
        compiler_params=pltpu.CompilerParams(
            dimension_semantics=("parallel",)),   # v7x: both TCs pull from HBM
        cost_estimate=cost,
    )(*arrays)

    # --- tiny finalize in plain JAX (num_blocks x 7 scalars) ---------------
    p = jnp.sum(partials_blocks[:, 0, :], axis=0)           # (128,)
    loss_beta = p[0] / n_beta
    loss_theta = p[1] / n_theta
    loss_twist = p[2] / n_twist
    lap_sum, w_sum = p[3], p[4]
    if size_average:
        safe_w = jnp.where(w_sum > 0.0, w_sum, 1.0)          # NaN-safe branch
        loss_uvd = jnp.where(w_sum > 0.0, lap_sum / safe_w, lap_sum)
    else:
        loss_uvd = lap_sum
    trans_loss = p[5] / n_trans
    scale_loss = p[6] / n_scale

    loss = (loss_beta * ELEMENTS["BETA_WEIGHT"]
            + loss_theta * ELEMENTS["THETA_WEIGHT"]
            + loss_twist * ELEMENTS["TWIST_WEIGHT"]
            + loss_uvd * ELEMENTS["UVD24_WEIGHT"]
            + 1.0 * trans_loss
            + 1.0 * scale_loss)
    return loss


# --------------------------------------------------------------------------- #
# Pure-JAX reference (mirrors the PyTorch forward) for correctness checking
# --------------------------------------------------------------------------- #
def reference_loss(output, labels):
    B = output["pred_shape"].shape[0]
    sw = labels["target_smpl_weight"]
    loss_beta = jnp.mean((output["pred_shape"] * sw - labels["target_beta"] * sw) ** 2)
    tw = labels["target_theta_weight"]
    loss_theta = jnp.mean((output["pred_theta_mats"] * sw * tw
                           - labels["target_theta"] * sw * tw) ** 2)
    tww = labels["target_twist_weight"]
    loss_twist = jnp.mean((output["pred_phi"] * tww - labels["target_twist"] * tww) ** 2)

    pred_xyz = output["pred_xyz_jts_29"][:, :72]
    target_xyz_weight = labels["target_xyz_weight_24"][:, :pred_xyz.shape[1]]

    pred_uvd = output["pred_uvd_jts"].reshape(B, -1, 3)[:, :29].reshape(B, 29, -1)
    sigma = output["pred_sigma"].reshape(B, 29, -1)
    target_uvd = labels["target_uvd_29"][:, :29 * 3].reshape(B, 29, -1)
    w = labels["target_weight_29"][:, :29 * 3].reshape(B, 29, -1)
    out = jnp.log(sigma / AMP) + jnp.abs(pred_uvd - target_uvd) / (SQRT2 * sigma + 1e-9)
    out = out * w
    loss_uvd = jnp.where(jnp.sum(w) > 0, jnp.sum(out) / jnp.sum(w), jnp.sum(out))

    loss = (loss_beta * ELEMENTS["BETA_WEIGHT"] + loss_theta * ELEMENTS["THETA_WEIGHT"]
            + loss_twist * ELEMENTS["TWIST_WEIGHT"] + loss_uvd * ELEMENTS["UVD24_WEIGHT"])

    cam_w = (jnp.sum(target_xyz_weight, axis=1) > 3).astype(jnp.float32)[:, None]
    trans_loss = jnp.mean((output["cam_trans"] * cam_w - labels["camera_trans"] * cam_w) ** 2)
    scale_loss = jnp.mean((output["cam_scale"] * cam_w - labels["camera_scale"] * cam_w) ** 2)
    return loss + trans_loss + scale_loss


if __name__ == "__main__":
    B = 2
    key = jax.random.PRNGKey(0)
    ks = jax.random.split(key, 19)

    output = {
        "pred_shape": jax.random.normal(ks[0], (B, 10), jnp.float32),
        "pred_theta_mats": jax.random.normal(ks[1], (B, 96), jnp.float32),   # 24*4
        "pred_phi": jax.random.normal(ks[2], (B, 23, 2), jnp.float32),
        "pred_xyz_jts_29": jax.random.normal(ks[3], (B, 29 * 3), jnp.float32),
        "pred_uvd_jts": jax.random.normal(ks[4], (B, 29 * 3), jnp.float32),
        "pred_sigma": jax.random.uniform(ks[5], (B, 29, 3), jnp.float32, 0.05, 1.0),
        "cam_trans": jax.random.normal(ks[6], (B, 3), jnp.float32),
        "cam_scale": jax.random.normal(ks[7], (B, 1), jnp.float32),
    }
    labels = {
        "target_smpl_weight": (jax.random.uniform(ks[8], (B, 1)) > 0.3).astype(jnp.float32),
        "target_beta": jax.random.normal(ks[9], (B, 10), jnp.float32),
        "target_theta": jax.random.normal(ks[10], (B, 96), jnp.float32),
        "target_theta_weight": (jax.random.uniform(ks[11], (B, 96)) > 0.2).astype(jnp.float32),
        "target_twist": jax.random.normal(ks[12], (B, 23, 2), jnp.float32),
        "target_twist_weight": (jax.random.uniform(ks[13], (B, 23, 2)) > 0.2).astype(jnp.float32),
        "target_xyz_weight_24": (jax.random.uniform(ks[14], (B, 72)) > 0.1).astype(jnp.float32),
        "target_uvd_29": jax.random.normal(ks[15], (B, 29 * 3), jnp.float32),
        "target_weight_29": (jax.random.uniform(ks[16], (B, 29 * 3)) > 0.2).astype(jnp.float32),
        "camera_trans": jax.random.normal(ks[17], (B, 3), jnp.float32),
        "camera_scale": jax.random.normal(ks[18], (B, 1), jnp.float32),
    }

    loss = jax.block_until_ready(laplace_loss_dim_smpl_cam(output, labels))
    ref = jax.block_until_ready(reference_loss(output, labels))
    assert jnp.allclose(loss, ref, rtol=1e-4, atol=1e-4), (loss, ref)
    print("KERNEL_OK")
</pallas_src>

<mosaic_0001>
module attributes {stable_mosaic.version = 11 : i64} {
  func.func @_loss_kernel(%arg0: i32, %arg1: memref<2x1xf32, #tpu.memory_space<vmem>>, %arg2: memref<2x10xf32, #tpu.memory_space<vmem>>, %arg3: memref<2x10xf32, #tpu.memory_space<vmem>>, %arg4: memref<2x96xf32, #tpu.memory_space<vmem>>, %arg5: memref<2x96xf32, #tpu.memory_space<vmem>>, %arg6: memref<2x96xf32, #tpu.memory_space<vmem>>, %arg7: memref<2x46xf32, #tpu.memory_space<vmem>>, %arg8: memref<2x46xf32, #tpu.memory_space<vmem>>, %arg9: memref<2x46xf32, #tpu.memory_space<vmem>>, %arg10: memref<2x87xf32, #tpu.memory_space<vmem>>, %arg11: memref<2x87xf32, #tpu.memory_space<vmem>>, %arg12: memref<2x87xf32, #tpu.memory_space<vmem>>, %arg13: memref<2x87xf32, #tpu.memory_space<vmem>>, %arg14: memref<2x72xf32, #tpu.memory_space<vmem>>, %arg15: memref<2x3xf32, #tpu.memory_space<vmem>>, %arg16: memref<2x3xf32, #tpu.memory_space<vmem>>, %arg17: memref<2x1xf32, #tpu.memory_space<vmem>>, %arg18: memref<2x1xf32, #tpu.memory_space<vmem>>, %arg19: memref<1x8x128xf32, #tpu.memory_space<vmem>>) attributes {dimension_semantics = [#tpu.dimension_semantics<parallel>], iteration_bounds = array<i64: 1>, scalar_prefetch = 0 : i64, scratch_operands = 0 : i64, tpu.core_type = #tpu.core_type<tc>, window_params = [{transform_indices = @transform_0, window_bounds = array<i64: 2, 1>}, {transform_indices = @transform_1, window_bounds = array<i64: 2, 10>}, {transform_indices = @transform_2, window_bounds = array<i64: 2, 10>}, {transform_indices = @transform_3, window_bounds = array<i64: 2, 96>}, {transform_indices = @transform_4, window_bounds = array<i64: 2, 96>}, {transform_indices = @transform_5, window_bounds = array<i64: 2, 96>}, {transform_indices = @transform_6, window_bounds = array<i64: 2, 46>}, {transform_indices = @transform_7, window_bounds = array<i64: 2, 46>}, {transform_indices = @transform_8, window_bounds = array<i64: 2, 46>}, {transform_indices = @transform_9, window_bounds = array<i64: 2, 87>}, {transform_indices = @transform_10, window_bounds = array<i64: 2, 87>}, {transform_indices = @transform_11, window_bounds = array<i64: 2, 87>}, {transform_indices = @transform_12, window_bounds = array<i64: 2, 87>}, {transform_indices = @transform_13, window_bounds = array<i64: 2, 72>}, {transform_indices = @transform_14, window_bounds = array<i64: 2, 3>}, {transform_indices = @transform_15, window_bounds = array<i64: 2, 3>}, {transform_indices = @transform_16, window_bounds = array<i64: 2, 1>}, {transform_indices = @transform_17, window_bounds = array<i64: 2, 1>}, {transform_indices = @transform_18, window_bounds = array<i64: 1, 8, 128>}]} {
    %c0 = arith.constant 0 : index
    %c0_0 = arith.constant 0 : index
    %0 = vector.load %arg1[%c0, %c0_0] : memref<2x1xf32, #tpu.memory_space<vmem>>, vector<2x1xf32>
    %c0_1 = arith.constant 0 : index
    %c0_2 = arith.constant 0 : index
    %1 = vector.load %arg2[%c0_1, %c0_2] : memref<2x10xf32, #tpu.memory_space<vmem>>, vector<2x10xf32>
    %2 = vector.broadcast %0 : vector<2x1xf32> to vector<2x10xf32>
    %3 = arith.mulf %1, %2 : vector<2x10xf32>
    %c0_3 = arith.constant 0 : index
    %c0_4 = arith.constant 0 : index
    %4 = vector.load %arg3[%c0_3, %c0_4] : memref<2x10xf32, #tpu.memory_space<vmem>>, vector<2x10xf32>
    %5 = vector.broadcast %0 : vector<2x1xf32> to vector<2x10xf32>
    %6 = arith.mulf %4, %5 : vector<2x10xf32>
    %7 = arith.subf %3, %6 : vector<2x10xf32>
    %8 = arith.mulf %7, %7 : vector<2x10xf32>
    %9 = vector.shape_cast %8 : vector<2x10xf32> to vector<1x2x10xf32>
    %cst = arith.constant dense<0.000000e+00> : vector<1xf32>
    %10 = vector.multi_reduction <add>, %9, %cst [1, 2] : vector<1x2x10xf32> to vector<1xf32>
    %11 = vector.shape_cast %10 : vector<1xf32> to vector<1x1x1xf32>
    %12 = vector.extract %11[0, 0, 0] : f32 from vector<1x1x1xf32>
    %c0_5 = arith.constant 0 : index
    %c0_6 = arith.constant 0 : index
    %13 = vector.load %arg6[%c0_5, %c0_6] : memref<2x96xf32, #tpu.memory_space<vmem>>, vector<2x96xf32>
    %c0_7 = arith.constant 0 : index
    %c0_8 = arith.constant 0 : index
    %14 = vector.load %arg4[%c0_7, %c0_8] : memref<2x96xf32, #tpu.memory_space<vmem>>, vector<2x96xf32>
    %15 = vector.broadcast %0 : vector<2x1xf32> to vector<2x96xf32>
    %16 = arith.mulf %14, %15 : vector<2x96xf32>
    %17 = arith.mulf %16, %13 : vector<2x96xf32>
    %c0_9 = arith.constant 0 : index
    %c0_10 = arith.constant 0 : index
    %18 = vector.load %arg5[%c0_9, %c0_10] : memref<2x96xf32, #tpu.memory_space<vmem>>, vector<2x96xf32>
    %19 = vector.broadcast %0 : vector<2x1xf32> to vector<2x96xf32>
    %20 = arith.mulf %18, %19 : vector<2x96xf32>
    %21 = arith.mulf %20, %13 : vector<2x96xf32>
    %22 = arith.subf %17, %21 : vector<2x96xf32>
    %23 = arith.mulf %22, %22 : vector<2x96xf32>
    %24 = vector.shape_cast %23 : vector<2x96xf32> to vector<1x2x96xf32>
    %cst_11 = arith.constant dense<0.000000e+00> : vector<1xf32>
    %25 = vector.multi_reduction <add>, %24, %cst_11 [1, 2] : vector<1x2x96xf32> to vector<1xf32>
    %26 = vector.shape_cast %25 : vector<1xf32> to vector<1x1x1xf32>
    %27 = vector.extract %26[0, 0, 0] : f32 from vector<1x1x1xf32>
    %c0_12 = arith.constant 0 : index
    %c0_13 = arith.constant 0 : index
    %28 = vector.load %arg9[%c0_12, %c0_13] : memref<2x46xf32, #tpu.memory_space<vmem>>, vector<2x46xf32>
    %c0_14 = arith.constant 0 : index
    %c0_15 = arith.constant 0 : index
    %29 = vector.load %arg7[%c0_14, %c0_15] : memref<2x46xf32, #tpu.memory_space<vmem>>, vector<2x46xf32>
    %30 = arith.mulf %29, %28 : vector<2x46xf32>
    %c0_16 = arith.constant 0 : index
    %c0_17 = arith.constant 0 : index
    %31 = vector.load %arg8[%c0_16, %c0_17] : memref<2x46xf32, #tpu.memory_space<vmem>>, vector<2x46xf32>
    %32 = arith.mulf %31, %28 : vector<2x46xf32>
    %33 = arith.subf %30, %32 : vector<2x46xf32>
    %34 = arith.mulf %33, %33 : vector<2x46xf32>
    %35 = vector.shape_cast %34 : vector<2x46xf32> to vector<1x2x46xf32>
    %cst_18 = arith.constant dense<0.000000e+00> : vector<1xf32>
    %36 = vector.multi_reduction <add>, %35, %cst_18 [1, 2] : vector<1x2x46xf32> to vector<1xf32>
    %37 = vector.shape_cast %36 : vector<1xf32> to vector<1x1x1xf32>
    %38 = vector.extract %37[0, 0, 0] : f32 from vector<1x1x1xf32>
    %c0_19 = arith.constant 0 : index
    %c0_20 = arith.constant 0 : index
    %39 = vector.load %arg11[%c0_19, %c0_20] : memref<2x87xf32, #tpu.memory_space<vmem>>, vector<2x87xf32>
    %c0_21 = arith.constant 0 : index
    %c0_22 = arith.constant 0 : index
    %40 = vector.load %arg13[%c0_21, %c0_22] : memref<2x87xf32, #tpu.memory_space<vmem>>, vector<2x87xf32>
    %c0_23 = arith.constant 0 : index
    %c0_24 = arith.constant 0 : index
    %41 = vector.load %arg10[%c0_23, %c0_24] : memref<2x87xf32, #tpu.memory_space<vmem>>, vector<2x87xf32>
    %c0_25 = arith.constant 0 : index
    %c0_26 = arith.constant 0 : index
    %42 = vector.load %arg12[%c0_25, %c0_26] : memref<2x87xf32, #tpu.memory_space<vmem>>, vector<2x87xf32>
    %43 = arith.subf %41, %42 : vector<2x87xf32>
    %44 = math.absf %43 : vector<2x87xf32>
    %cst_27 = arith.constant 0.398942292 : f32
    %45 = vector.broadcast %cst_27 : f32 to vector<2x87xf32>
    %46 = arith.divf %39, %45 : vector<2x87xf32>
    %47 = math.log %46 : vector<2x87xf32>
    %cst_28 = arith.constant 1.41421354 : f32
    %48 = vector.broadcast %cst_28 : f32 to vector<2x87xf32>
    %49 = arith.mulf %48, %39 : vector<2x87xf32>
    %cst_29 = arith.constant 9.99999971E-10 : f32
    %50 = vector.broadcast %cst_29 : f32 to vector<2x87xf32>
    %51 = arith.addf %49, %50 : vector<2x87xf32>
    %52 = arith.divf %44, %51 : vector<2x87xf32>
    %53 = arith.addf %47, %52 : vector<2x87xf32>
    %54 = arith.mulf %53, %40 : vector<2x87xf32>
    %55 = vector.shape_cast %54 : vector<2x87xf32> to vector<1x2x87xf32>
    %cst_30 = arith.constant dense<0.000000e+00> : vector<1xf32>
    %56 = vector.multi_reduction <add>, %55, %cst_30 [1, 2] : vector<1x2x87xf32> to vector<1xf32>
    %57 = vector.shape_cast %56 : vector<1xf32> to vector<1x1x1xf32>
    %58 = vector.extract %57[0, 0, 0] : f32 from vector<1x1x1xf32>
    %59 = vector.shape_cast %40 : vector<2x87xf32> to vector<1x2x87xf32>
    %cst_31 = arith.constant dense<0.000000e+00> : vector<1xf32>
    %60 = vector.multi_reduction <add>, %59, %cst_31 [1, 2] : vector<1x2x87xf32> to vector<1xf32>
    %61 = vector.shape_cast %60 : vector<1xf32> to vector<1x1x1xf32>
    %62 = vector.extract %61[0, 0, 0] : f32 from vector<1x1x1xf32>
    %c0_32 = arith.constant 0 : index
    %c0_33 = arith.constant 0 : index
    %63 = vector.load %arg14[%c0_32, %c0_33] : memref<2x72xf32, #tpu.memory_space<vmem>>, vector<2x72xf32>
    %cst_34 = arith.constant dense<0.000000e+00> : vector<2xf32>
    %64 = vector.multi_reduction <add>, %63, %cst_34 [1] : vector<2x72xf32> to vector<2xf32>
    %65 = vector.shape_cast %64 : vector<2xf32> to vector<2x1xf32>
    %cst_35 = arith.constant 3.000000e+00 : f32
    %66 = vector.broadcast %cst_35 : f32 to vector<2x1xf32>
    %67 = arith.cmpf ogt, %65, %66 : vector<2x1xf32>
    %68 = arith.extui %67 : vector<2x1xi1> to vector<2x1xi32>
    %69 = arith.sitofp %68 : vector<2x1xi32> to vector<2x1xf32>
    %c0_36 = arith.constant 0 : index
    %c0_37 = arith.constant 0 : index
    %70 = vector.load %arg15[%c0_36, %c0_37] : memref<2x3xf32, #tpu.memory_space<vmem>>, vector<2x3xf32>
    %71 = vector.broadcast %69 : vector<2x1xf32> to vector<2x3xf32>
    %72 = arith.mulf %70, %71 : vector<2x3xf32>
    %c0_38 = arith.constant 0 : index
    %c0_39 = arith.constant 0 : index
    %73 = vector.load %arg16[%c0_38, %c0_39] : memref<2x3xf32, #tpu.memory_space<vmem>>, vector<2x3xf32>
    %74 = vector.broadcast %69 : vector<2x1xf32> to vector<2x3xf32>
    %75 = arith.mulf %73, %74 : vector<2x3xf32>
    %76 = arith.subf %72, %75 : vector<2x3xf32>
    %c0_40 = arith.constant 0 : index
    %c0_41 = arith.constant 0 : index
    %77 = vector.load %arg17[%c0_40, %c0_41] : memref<2x1xf32, #tpu.memory_space<vmem>>, vector<2x1xf32>
    %78 = arith.mulf %77, %69 : vector<2x1xf32>
    %c0_42 = arith.constant 0 : index
    %c0_43 = arith.constant 0 : index
    %79 = vector.load %arg18[%c0_42, %c0_43] : memref<2x1xf32, #tpu.memory_space<vmem>>, vector<2x1xf32>
    %80 = arith.mulf %79, %69 : vector<2x1xf32>
    %81 = arith.subf %78, %80 : vector<2x1xf32>
    %82 = arith.mulf %76, %76 : vector<2x3xf32>
    %83 = vector.shape_cast %82 : vector<2x3xf32> to vector<1x2x3xf32>
    %cst_44 = arith.constant dense<0.000000e+00> : vector<1xf32>
    %84 = vector.multi_reduction <add>, %83, %cst_44 [1, 2] : vector<1x2x3xf32> to vector<1xf32>
    %85 = vector.shape_cast %84 : vector<1xf32> to vector<1x1x1xf32>
    %86 = vector.extract %85[0, 0, 0] : f32 from vector<1x1x1xf32>
    %87 = arith.mulf %81, %81 : vector<2x1xf32>
    %88 = vector.shape_cast %87 : vector<2x1xf32> to vector<1x2x1xf32>
    %cst_45 = arith.constant dense<0.000000e+00> : vector<1xf32>
    %89 = vector.multi_reduction <add>, %88, %cst_45 [1, 2] : vector<1x2x1xf32> to vector<1xf32>
    %90 = vector.shape_cast %89 : vector<1xf32> to vector<1x1x1xf32>
    %91 = vector.extract %90[0, 0, 0] : f32 from vector<1x1x1xf32>
    %92 = tpu.iota {dimensions = array<i32: 2>} : vector<1x8x128xi32>
    %cst_46 = arith.constant 0.000000e+00 : f32
    %93 = vector.broadcast %cst_46 : f32 to vector<1x8x128xf32>
    %c0_i32 = arith.constant 0 : i32
    %94 = vector.broadcast %c0_i32 : i32 to vector<1x8x128xi32>
    %95 = arith.cmpi eq, %92, %94 : vector<1x8x128xi32>
    %96 = vector.broadcast %12 : f32 to vector<1x8x128xf32>
    %97 = arith.select %95, %96, %93 : vector<1x8x128xi1>, vector<1x8x128xf32>
    %c1_i32 = arith.constant 1 : i32
    %98 = vector.broadcast %c1_i32 : i32 to vector<1x8x128xi32>
    %99 = arith.cmpi eq, %92, %98 : vector<1x8x128xi32>
    %100 = vector.broadcast %27 : f32 to vector<1x8x128xf32>
    %101 = arith.select %99, %100, %97 : vector<1x8x128xi1>, vector<1x8x128xf32>
    %c2_i32 = arith.constant 2 : i32
    %102 = vector.broadcast %c2_i32 : i32 to vector<1x8x128xi32>
    %103 = arith.cmpi eq, %92, %102 : vector<1x8x128xi32>
    %104 = vector.broadcast %38 : f32 to vector<1x8x128xf32>
    %105 = arith.select %103, %104, %101 : vector<1x8x128xi1>, vector<1x8x128xf32>
    %c3_i32 = arith.constant 3 : i32
    %106 = vector.broadcast %c3_i32 : i32 to vector<1x8x128xi32>
    %107 = arith.cmpi eq, %92, %106 : vector<1x8x128xi32>
    %108 = vector.broadcast %58 : f32 to vector<1x8x128xf32>
    %109 = arith.select %107, %108, %105 : vector<1x8x128xi1>, vector<1x8x128xf32>
    %c4_i32 = arith.constant 4 : i32
    %110 = vector.broadcast %c4_i32 : i32 to vector<1x8x128xi32>
    %111 = arith.cmpi eq, %92, %110 : vector<1x8x128xi32>
    %112 = vector.broadcast %62 : f32 to vector<1x8x128xf32>
    %113 = arith.select %111, %112, %109 : vector<1x8x128xi1>, vector<1x8x128xf32>
    %c5_i32 = arith.constant 5 : i32
    %114 = vector.broadcast %c5_i32 : i32 to vector<1x8x128xi32>
    %115 = arith.cmpi eq, %92, %114 : vector<1x8x128xi32>
    %116 = vector.broadcast %86 : f32 to vector<1x8x128xf32>
    %117 = arith.select %115, %116, %113 : vector<1x8x128xi1>, vector<1x8x128xf32>
    %c6_i32 = arith.constant 6 : i32
    %118 = vector.broadcast %c6_i32 : i32 to vector<1x8x128xi32>
    %119 = arith.cmpi eq, %92, %118 : vector<1x8x128xi32>
    %120 = vector.broadcast %91 : f32 to vector<1x8x128xf32>
    %121 = arith.select %119, %120, %117 : vector<1x8x128xi1>, vector<1x8x128xf32>
    %c0_47 = arith.constant 0 : index
    %c0_48 = arith.constant 0 : index
    %c0_49 = arith.constant 0 : index
    %122 = vector.load %arg19[%c0_47, %c0_48, %c0_49] : memref<1x8x128xf32, #tpu.memory_space<vmem>>, vector<1x8x128xf32>
    tpu.vector_store %arg19[%c0_47, %c0_48, %c0_49], %121 {strides = array<i32>} : memref<1x8x128xf32, #tpu.memory_space<vmem>>, vector<1x8x128xf32>,
    return
  }
  func.func @transform_0(%arg0: i32) -> (i32, i32) {
    %c0_i32 = arith.constant 0 : i32
    %c0_i32_0 = arith.constant 0 : i32
    return %arg0, %c0_i32 : i32, i32
  }
  func.func @transform_1(%arg0: i32) -> (i32, i32) {
    %c0_i32 = arith.constant 0 : i32
    %c0_i32_0 = arith.constant 0 : i32
    return %arg0, %c0_i32 : i32, i32
  }
  func.func @transform_2(%arg0: i32) -> (i32, i32) {
    %c0_i32 = arith.constant 0 : i32
    %c0_i32_0 = arith.constant 0 : i32
    return %arg0, %c0_i32 : i32, i32
  }
  func.func @transform_3(%arg0: i32) -> (i32, i32) {
    %c0_i32 = arith.constant 0 : i32
    %c0_i32_0 = arith.constant 0 : i32
    return %arg0, %c0_i32 : i32, i32
  }
  func.func @transform_4(%arg0: i32) -> (i32, i32) {
    %c0_i32 = arith.constant 0 : i32
    %c0_i32_0 = arith.constant 0 : i32
    return %arg0, %c0_i32 : i32, i32
  }
  func.func @transform_5(%arg0: i32) -> (i32, i32) {
    %c0_i32 = arith.constant 0 : i32
    %c0_i32_0 = arith.constant 0 : i32
    return %arg0, %c0_i32 : i32, i32
  }
  func.func @transform_6(%arg0: i32) -> (i32, i32) {
    %c0_i32 = arith.constant 0 : i32
    %c0_i32_0 = arith.constant 0 : i32
    return %arg0, %c0_i32 : i32, i32
  }
  func.func @transform_7(%arg0: i32) -> (i32, i32) {
    %c0_i32 = arith.constant 0 : i32
    %c0_i32_0 = arith.constant 0 : i32
    return %arg0, %c0_i32 : i32, i32
  }
  func.func @transform_8(%arg0: i32) -> (i32, i32) {
    %c0_i32 = arith.constant 0 : i32
    %c0_i32_0 = arith.constant 0 : i32
    return %arg0, %c0_i32 : i32, i32
  }
  func.func @transform_9(%arg0: i32) -> (i32, i32) {
    %c0_i32 = arith.constant 0 : i32
    %c0_i32_0 = arith.constant 0 : i32
    return %arg0, %c0_i32 : i32, i32
  }
  func.func @transform_10(%arg0: i32) -> (i32, i32) {
    %c0_i32 = arith.constant 0 : i32
    %c0_i32_0 = arith.constant 0 : i32
    return %arg0, %c0_i32 : i32, i32
  }
  func.func @transform_11(%arg0: i32) -> (i32, i32) {
    %c0_i32 = arith.constant 0 : i32
    %c0_i32_0 = arith.constant 0 : i32
    return %arg0, %c0_i32 : i32, i32
  }
  func.func @transform_12(%arg0: i32) -> (i32, i32) {
    %c0_i32 = arith.constant 0 : i32
    %c0_i32_0 = arith.constant 0 : i32
    return %arg0, %c0_i32 : i32, i32
  }
  func.func @transform_13(%arg0: i32) -> (i32, i32) {
    %c0_i32 = arith.constant 0 : i32
    %c0_i32_0 = arith.constant 0 : i32
    return %arg0, %c0_i32 : i32, i32
  }
  func.func @transform_14(%arg0: i32) -> (i32, i32) {
    %c0_i32 = arith.constant 0 : i32
    %c0_i32_0 = arith.constant 0 : i32
    return %arg0, %c0_i32 : i32, i32
  }
  func.func @transform_15(%arg0: i32) -> (i32, i32) {
    %c0_i32 = arith.constant 0 : i32
    %c0_i32_0 = arith.constant 0 : i32
    return %arg0, %c0_i32 : i32, i32
  }
  func.func @transform_16(%arg0: i32) -> (i32, i32) {
    %c0_i32 = arith.constant 0 : i32
    %c0_i32_0 = arith.constant 0 : i32
    return %arg0, %c0_i32 : i32, i32
  }
  func.func @transform_17(%arg0: i32) -> (i32, i32) {
    %c0_i32 = arith.constant 0 : i32
    %c0_i32_0 = arith.constant 0 : i32
    return %arg0, %c0_i32 : i32, i32
  }
  func.func @transform_18(%arg0: i32) -> (i32, i32, i32) {
    %c0_i32 = arith.constant 0 : i32
    %c0_i32_0 = arith.constant 0 : i32
    %c0_i32_1 = arith.constant 0 : i32
    return %arg0, %c0_i32, %c0_i32_0 : i32, i32, i32
  }
}

</mosaic_0001>

<llo_original>
// kernel: tpu_custom_call.1
$region0: #{tpu_custom_call.1}
  #allocation0 [shape = 'u32[]', space=smem, size = 0x4, offset = 0x4, fixed_abs, tag = 'smem constant byte address 0x4 - core index']
  #allocation1 [shape = 'u32[144,128]{1,0:T(1,128)}', space=vmem, size = 0x12000, scoped, tag = 'internal scratch']
  %s0 = inlined_call_operand.vmem [shape: f32[2,1], index: 0, kind: input, shape index: {}]
  %s1 = inlined_call_operand.vmem [shape: f32[2,10], index: 1, kind: input, shape index: {}]
  %s2 = inlined_call_operand.vmem [shape: f32[2,10], index: 2, kind: input, shape index: {}]
  %s3 = inlined_call_operand.vmem [shape: f32[2,96], index: 3, kind: input, shape index: {}]
  %s4 = inlined_call_operand.vmem [shape: f32[2,96], index: 4, kind: input, shape index: {}]
  %s5 = inlined_call_operand.vmem [shape: f32[2,96], index: 5, kind: input, shape index: {}]
  %s6 = inlined_call_operand.vmem [shape: f32[2,46], index: 6, kind: input, shape index: {}]
  %s7 = inlined_call_operand.vmem [shape: f32[2,46], index: 7, kind: input, shape index: {}]
  %s8 = inlined_call_operand.vmem [shape: f32[2,46], index: 8, kind: input, shape index: {}]
  %s9 = inlined_call_operand.vmem [shape: f32[2,87], index: 9, kind: input, shape index: {}]
  %s10 = inlined_call_operand.vmem [shape: f32[2,87], index: 10, kind: input, shape index: {}]
  %s11 = inlined_call_operand.vmem [shape: f32[2,87], index: 11, kind: input, shape index: {}]
  %s12 = inlined_call_operand.vmem [shape: f32[2,87], index: 12, kind: input, shape index: {}]
  %s13 = inlined_call_operand.vmem [shape: f32[2,72], index: 13, kind: input, shape index: {}]
  %s14 = inlined_call_operand.vmem [shape: f32[2,3], index: 14, kind: input, shape index: {}]
  %s15 = inlined_call_operand.vmem [shape: f32[2,3], index: 15, kind: input, shape index: {}]
  %s16 = inlined_call_operand.vmem [shape: f32[2,1], index: 16, kind: input, shape index: {}]
  %s17 = inlined_call_operand.vmem [shape: f32[2,1], index: 17, kind: input, shape index: {}]
  %s18 = inlined_call_operand.hbm [shape: f32[1,8,128], index: 18, kind: output, shape index: {}]
  %s19 = sld [smem:[#allocation0]]
  $region82: #{tpu_custom_call.1} parent=0
    _
  %s21 = ssub.s32 1, %s19
  %s22 = scalar_select 0, %s21, %s19
  $region1: #{tpu_custom_call.1} parent=0
    #allocation2 [shape = 'u8[4096]{0}', space=vmem, size = 0x1000, scoped, tag = 'output window, operand 0, single buffered']
    #allocation3 [shape = 's32[1]{0}', space=sflag, size = 0x4, scoped, tag = 'scoped memory for tpu_custom_call.1']
    %23 = vsyncpa [#allocation3], 0
    // Predicated region
    $region2: #{tpu_custom_call.1} parent=1 // pred_check
      _
    $region3: #{tpu_custom_call.1} parent=1 // pred_check_branch
      %25 = sbr.rel (0) target = $region5
    $region4: #{tpu_custom_call.1} parent=1 // pred_region
      _
    $region5: #{tpu_custom_call.1} parent=1 // pred_fallthru
      _
    // Predicated region
    $region6: #{tpu_custom_call.1} parent=1 // pred_check
      _
    $region7: #{tpu_custom_call.1} parent=1 // pred_check_branch
      %27 = sbr.rel (0) target = $region9
    $region8: #{tpu_custom_call.1} parent=1 // pred_region
      _
    $region9: #{tpu_custom_call.1} parent=1 // pred_fallthru
      _
    // Predicated region
    $region10: #{tpu_custom_call.1} parent=1 // pred_check
      _
    $region11: #{tpu_custom_call.1} parent=1 // pred_check_branch
      %29 = sbr.rel (0) target = $region13
    $region12: #{tpu_custom_call.1} parent=1 // pred_region
      _
    $region13: #{tpu_custom_call.1} parent=1 // pred_fallthru
      _
    // Predicated region
    $region14: #{tpu_custom_call.1} parent=1 // pred_check
      _
    $region15: #{tpu_custom_call.1} parent=1 // pred_check_branch
      %31 = sbr.rel (0) target = $region17
    $region16: #{tpu_custom_call.1} parent=1 // pred_region
      _
    $region17: #{tpu_custom_call.1} parent=1 // pred_fallthru
      _
    // Predicated region
    $region18: #{tpu_custom_call.1} parent=1 // pred_check
      _
    $region19: #{tpu_custom_call.1} parent=1 // pred_check_branch
      %33 = sbr.rel (0) target = $region21
    $region20: #{tpu_custom_call.1} parent=1 // pred_region
      _
    $region21: #{tpu_custom_call.1} parent=1 // pred_fallthru
      _
    // Predicated region
    $region22: #{tpu_custom_call.1} parent=1 // pred_check
      _
    $region23: #{tpu_custom_call.1} parent=1 // pred_check_branch
      %35 = sbr.rel (0) target = $region25
    $region24: #{tpu_custom_call.1} parent=1 // pred_region
      _
    $region25: #{tpu_custom_call.1} parent=1 // pred_fallthru
      _
    // Predicated region
    $region26: #{tpu_custom_call.1} parent=1 // pred_check
      _
    $region27: #{tpu_custom_call.1} parent=1 // pred_check_branch
      %37 = sbr.rel (0) target = $region29
    $region28: #{tpu_custom_call.1} parent=1 // pred_region
      _
    $region29: #{tpu_custom_call.1} parent=1 // pred_fallthru
      _
    // Predicated region
    $region30: #{tpu_custom_call.1} parent=1 // pred_check
      _
    $region31: #{tpu_custom_call.1} parent=1 // pred_check_branch
      %39 = sbr.rel (0) target = $region33
    $region32: #{tpu_custom_call.1} parent=1 // pred_region
      _
    $region33: #{tpu_custom_call.1} parent=1 // pred_fallthru
      _
    // Predicated region
    $region34: #{tpu_custom_call.1} parent=1 // pred_check
      _
    $region35: #{tpu_custom_call.1} parent=1 // pred_check_branch
      %41 = sbr.rel (0) target = $region37
    $region36: #{tpu_custom_call.1} parent=1 // pred_region
      _
    $region37: #{tpu_custom_call.1} parent=1 // pred_fallthru
      _
    // Predicated region
    $region38: #{tpu_custom_call.1} parent=1 // pred_check
      _
    $region39: #{tpu_custom_call.1} parent=1 // pred_check_branch
      %43 = sbr.rel (0) target = $region41
    $region40: #{tpu_custom_call.1} parent=1 // pred_region
      _
    $region41: #{tpu_custom_call.1} parent=1 // pred_fallthru
      _
    // Predicated region
    $region42: #{tpu_custom_call.1} parent=1 // pred_check
      _
    $region43: #{tpu_custom_call.1} parent=1 // pred_check_branch
      %45 = sbr.rel (0) target = $region45
    $region44: #{tpu_custom_call.1} parent=1 // pred_region
      _
    $region45: #{tpu_custom_call.1} parent=1 // pred_fallthru
      _
    // Predicated region
    $region46: #{tpu_custom_call.1} parent=1 // pred_check
      _
    $region47: #{tpu_custom_call.1} parent=1 // pred_check_branch
      %47 = sbr.rel (0) target = $region49
    $region48: #{tpu_custom_call.1} parent=1 // pred_region
      _
    $region49: #{tpu_custom_call.1} parent=1 // pred_fallthru
      _
    // Predicated region
    $region50: #{tpu_custom_call.1} parent=1 // pred_check
      _
    $region51: #{tpu_custom_call.1} parent=1 // pred_check_branch
      %49 = sbr.rel (0) target = $region53
    $region52: #{tpu_custom_call.1} parent=1 // pred_region
      _
    $region53: #{tpu_custom_call.1} parent=1 // pred_fallthru
      _
    // Predicated region
    $region54: #{tpu_custom_call.1} parent=1 // pred_check
      _
    $region55: #{tpu_custom_call.1} parent=1 // pred_check_branch
      %51 = sbr.rel (0) target = $region57
    $region56: #{tpu_custom_call.1} parent=1 // pred_region
      _
    $region57: #{tpu_custom_call.1} parent=1 // pred_fallthru
      _
    // Predicated region
    $region58: #{tpu_custom_call.1} parent=1 // pred_check
      _
    $region59: #{tpu_custom_call.1} parent=1 // pred_check_branch
      %53 = sbr.rel (0) target = $region61
    $region60: #{tpu_custom_call.1} parent=1 // pred_region
      _
    $region61: #{tpu_custom_call.1} parent=1 // pred_fallthru
      _
    // Predicated region
    $region62: #{tpu_custom_call.1} parent=1 // pred_check
      _
    $region63: #{tpu_custom_call.1} parent=1 // pred_check_branch
      %55 = sbr.rel (0) target = $region65
    $region64: #{tpu_custom_call.1} parent=1 // pred_region
      _
    $region65: #{tpu_custom_call.1} parent=1 // pred_fallthru
      _
    // Predicated region
    $region66: #{tpu_custom_call.1} parent=1 // pred_check
      _
    $region67: #{tpu_custom_call.1} parent=1 // pred_check_branch
      %57 = sbr.rel (0) target = $region69
    $region68: #{tpu_custom_call.1} parent=1 // pred_region
      _
    $region69: #{tpu_custom_call.1} parent=1 // pred_fallthru
      _
    // Predicated region
    $region70: #{tpu_custom_call.1} parent=1 // pred_check
      _
    $region71: #{tpu_custom_call.1} parent=1 // pred_check_branch
      %59 = sbr.rel (0) target = $region73
    $region72: #{tpu_custom_call.1} parent=1 // pred_region
      _
    $region73: #{tpu_custom_call.1} parent=1 // pred_fallthru
      _
    %v60 = vld [vmem:[%s0] sm:$0x3]
    %v61 = vld [vmem:[%s1] sm:$0x3]
    %63 = vset.pattern.permute.xlu0 0
    %64 = vperm.xlu0 %63, %v60
    %v65 = vpop.permute.xlu0 %64
    %v67 = vmul.f32 %v61, %v65
    %v68 = vld [vmem:[%s2] sm:$0x3]
    %v69 = vmul.f32 %v68, %v65
    %v70 = vsub.f32 %v67, %v69
    %v71 = vmul.f32 %v70, %v70
    %vm72 = vcmask 74752
    %v73 = vsel %vm72, %v71, 0.0
    %74 = vadd.xlane.f32.xlu0 %v73
    %v75 = vpop.xlane.xlu0 %74
    %v76 = vrot.slane %v75, 4
    %v77 = vadd.f32 %v75, %v76
    %v78 = vrot.slane %v77, 2
    %v79 = vadd.f32 %v77, %v78
    %v80 = vrot.slane %v79, 1
    %v81 = vadd.f32 %v79, %v80
    %s82 = vtos %v81
    %v83 = vld [vmem:[%s5] sm:$0x3]
    %v84 = vld [vmem:[%s3] sm:$0x3]
    %v85 = vmul.f32 %v84, %v65
    %v86 = vmul.f32 %v85, %v83
    %v87 = vld [vmem:[%s4] sm:$0x3]
    %v88 = vmul.f32 %v87, %v65
    %v89 = vmul.f32 %v88, %v83
    %v90 = vsub.f32 %v86, %v89
    %v91 = vmul.f32 %v90, %v90
    %vm92 = vcmask 779264
    %v93 = vsel %vm92, %v91, 0.0
    %94 = vadd.xlane.f32.xlu0 %v93
    %v95 = vpop.xlane.xlu0 %94
    %v96 = vrot.slane %v95, 4
    %v97 = vadd.f32 %v95, %v96
    %v98 = vrot.slane %v97, 2
    %v99 = vadd.f32 %v97, %v98
    %v100 = vrot.slane %v99, 1
    %v101 = vadd.f32 %v99, %v100
    %s102 = vtos %v101
    %v103 = vld [vmem:[%s8] sm:$0x3]
    %v104 = vld [vmem:[%s6] sm:$0x3]
    %v105 = vmul.f32 %v104, %v103
    %v106 = vld [vmem:[%s7] sm:$0x3]
    %v107 = vmul.f32 %v106, %v103
    %v108 = vsub.f32 %v105, %v107
    %v109 = vmul.f32 %v108, %v108
    %vm110 = vcmask 369664
    %v111 = vsel %vm110, %v109, 0.0
    %112 = vadd.xlane.f32.xlu0 %v111
    %v113 = vpop.xlane.xlu0 %112
    %v114 = vrot.slane %v113, 4
    %v115 = vadd.f32 %v113, %v114
    %v116 = vrot.slane %v115, 2
    %v117 = vadd.f32 %v115, %v116
    %v118 = vrot.slane %v117, 1
    %v119 = vadd.f32 %v117, %v118
    %s120 = vtos %v119
    %v121 = vld [vmem:[%s10] sm:$0x3]
    %v122 = vld [vmem:[%s12] sm:$0x3]
    %v123 = vld [vmem:[%s9] sm:$0x3]
    %v124 = vld [vmem:[%s11] sm:$0x3]
    %v125 = vsub.f32 %v123, %v124
    %v126 = vand.u32 2147483647, %v125
    %v127 = vrcp.pop 0.3989423
    %v128 = vmul.f32 %v121, %v127
    %v129 = vlog2.pop %v128
    %v130 = vmul.f32 %v129, 0.6931472
    %v131 = vmul.f32 %v121, 1.4142135
    %v132 = vadd.f32 %v131, 1e-09
    %v133 = vrcp.pop %v132
    %v134 = vmul.f32 %v126, %v133
    %v135 = vadd.f32 %v130, %v134
    %v136 = vmul.f32 %v135, %v122
    %vm137 = vcmask 705536
    %v138 = vsel %vm137, %v136, 0.0
    %139 = vadd.xlane.f32.xlu0 %v138
    %v140 = vpop.xlane.xlu0 %139
    %v141 = vrot.slane %v140, 4
    %v142 = vadd.f32 %v140, %v141
    %v143 = vrot.slane %v142, 2
    %v144 = vadd.f32 %v142, %v143
    %v145 = vrot.slane %v144, 1
    %v146 = vadd.f32 %v144, %v145
    %s147 = vtos %v146
    %v148 = vsel %vm137, %v122, 0.0
    %149 = vadd.xlane.f32.xlu0 %v148
    %v150 = vpop.xlane.xlu0 %149
    %v151 = vrot.slane %v150, 4
    %v152 = vadd.f32 %v150, %v151
    %v153 = vrot.slane %v152, 2
    %v154 = vadd.f32 %v152, %v153
    %v155 = vrot.slane %v154, 1
    %v156 = vadd.f32 %v154, %v155
    %s157 = vtos %v156
    %v158 = vld [vmem:[%s13] sm:$0x3]
    %vm159 = vcmask 582656
    %v160 = vsel %vm159, %v158, 0.0
    %161 = vadd.xlane.f32.xlu0 %v160
    %v162 = vpop.xlane.xlu0 %161
    %vm163 = vcmp.gt.f32.partialorder %v162, 3.0
    %v164 = vsel %vm163, 1, 0
    %v165 = vcvt.s32.f32 %v164
    %v166 = vld [vmem:[%s14] sm:$0x3]
    %v167 = vmul.f32 %v166, %v165
    %v168 = vld [vmem:[%s15] sm:$0x3]
    %v169 = vmul.f32 %v168, %v165
    %v170 = vsub.f32 %v167, %v169
    %v171 = vld [vmem:[%s16] sm:$0x3]
    %v172 = vmul.f32 %v171, %v165
    %v173 = vld [vmem:[%s17] sm:$0x3]
    %v174 = vmul.f32 %v173, %v165
    %v175 = vsub.f32 %v172, %v174
    %v176 = vmul.f32 %v170, %v170
    %vm177 = vcmask 17408
    %v178 = vsel %vm177, %v176, 0.0
    %179 = vadd.xlane.f32.xlu0 %v178
    %v180 = vpop.xlane.xlu0 %179
    %v181 = vrot.slane %v180, 4
    %v182 = vadd.f32 %v180, %v181
    %v183 = vrot.slane %v182, 2
    %v184 = vadd.f32 %v182, %v183
    %v185 = vrot.slane %v184, 1
    %v186 = vadd.f32 %v184, %v185
    %s187 = vtos %v186
    %v188 = vmul.f32 %v175, %v175
    %vm189 = vcmask 1024
    %v190 = vsel %vm189, %v188, 0.0
    %191 = vadd.xlane.f32.xlu0 %v190
    %v192 = vpop.xlane.xlu0 %191
    %v193 = vrot.slane %v192, 4
    %v194 = vadd.f32 %v192, %v193
    %v195 = vrot.slane %v194, 2
    %v196 = vadd.f32 %v194, %v195
    %v197 = vrot.slane %v196, 1
    %v198 = vadd.f32 %v196, %v197
    %s199 = vtos %v198
    %v200 = vlaneseq
    %v201 = vand.u32 %v200, 127
    %vm202 = vcmp.eq.s32.totalorder %v201, 0
    %v203 = vstv %s82
    %v204 = vsel %vm202, %v203, 0.0
    %vm205 = vcmp.eq.s32.totalorder %v201, 1
    %v206 = vstv %s102
    %v207 = vsel %vm205, %v206, %v204
    %vm208 = vcmp.eq.s32.totalorder %v201, 2
    %v209 = vstv %s120
    %v210 = vsel %vm208, %v209, %v207
    %vm211 = vcmp.eq.s32.totalorder %v201, 3
    %v212 = vstv %s147
    %v213 = vsel %vm211, %v212, %v210
    %vm214 = vcmp.eq.s32.totalorder %v201, 4
    %v215 = vstv %s157
    %v216 = vsel %vm214, %v215, %v213
    %vm217 = vcmp.eq.s32.totalorder %v201, 5
    %v218 = vstv %s187
    %v219 = vsel %vm217, %v218, %v216
    %vm220 = vcmp.eq.s32.totalorder %v201, 6
    %v221 = vstv %s199
    %v222 = vsel %vm220, %v221, %v219
    %223 = vst [vmem:[#allocation2] sm:$0xff] %v222
    // Predicated region
    $region74: #{tpu_custom_call.1} parent=1 // pred_check
      _
    $region75: #{tpu_custom_call.1} parent=1 // pred_check_branch
      %225 = sbr.rel (0) target = $region77
    $region76: #{tpu_custom_call.1} parent=1 // pred_region
      %s227 = ssub.s32 128, 128
      %228 = vsyncadd [#allocation3], %s227
      %s230 = sshll.u32 [#allocation2], 4
      %s231 = int_to_ptr.vmem [resolvable:$true] %s230
      %233 = dma.vmem_to_hbm [thread:$0]  %s231, 128, %s18, [#allocation3]
    $region77: #{tpu_custom_call.1} parent=1 // pred_fallthru
      _
    // Predicated region
    $region78: #{tpu_custom_call.1} parent=1 // pred_check
      _
    $region79: #{tpu_custom_call.1} parent=1 // pred_check_branch
      %235 = sbr.rel (0) target = $region81
    $region80: #{tpu_custom_call.1} parent=1 // pred_region
      %236 = dma.done [#allocation3], 128
    $region81: #{tpu_custom_call.1} parent=1 // pred_fallthru
      _
    %237 = vsyncpa [#allocation3], 1

</llo_original>
